<compile_context>
chip_gen: v7x
topology: tpu7x:2x2x1
jax: 0.10.0
libtpu: 0.0.40
codegen_flags: <defaults>
</compile_context>

<pallas_src>
import jax
import jax.numpy as jnp
from jax.experimental import pallas as pl
from jax.experimental.pallas import tpu as pltpu


def _round_up(n: int, m: int) -> int:
    return ((n + m - 1) // m) * m


def _softplus(x):
    # Numerically stable softplus in f32; matches torch.nn.Softplus semantics.
    return jnp.maximum(x, 0.0) + jnp.log1p(jnp.exp(-jnp.abs(x)))


def _block_diag(w, p: int):
    """(fin, fout) -> (p*fin, p*fout) block-diagonal with p copies of w."""
    if p == 1:
        return w
    fin, fout = w.shape
    eye = jnp.eye(p, dtype=w.dtype)
    return (eye[:, None, :, None] * w[None, :, None, :]).reshape(p * fin, p * fout)


def mlp_kernel(x_ref, w0_ref, b0_ref, w1_ref, b1_ref, wo_ref, bo_ref, o_ref):
    # x streamed at its native dtype; cast to bf16 in-kernel for the MXU.
    x = x_ref[...].astype(w0_ref.dtype)

    # fc0 + softplus  (bf16 MXU inputs, f32 accumulation / elementwise)
    h = jnp.dot(x, w0_ref[...], preferred_element_type=jnp.float32)
    h = _softplus(h + b0_ref[...])

    # fc1 + softplus
    h = jnp.dot(h.astype(w1_ref.dtype), w1_ref[...],
                preferred_element_type=jnp.float32)
    h = _softplus(h + b1_ref[...])

    # fcout (no activation); un-padded output columns, f32 store.
    out = jnp.dot(h.astype(wo_ref.dtype), wo_ref[...],
                  preferred_element_type=jnp.float32)
    o_ref[...] = (out + bo_ref[...]).astype(o_ref.dtype)


def mlp_forward(x, params, *, tile_rows: int = 2048):
    """x: (..., in_dim) -> (..., out_dim). params: dict of weights/biases."""
    w0, b0 = params["w0"], params["b0"]
    w1, b1 = params["w1"], params["b1"]
    wo, bo = params["wo"], params["bo"]

    in_dim, h0 = w0.shape
    h1 = w1.shape[1]
    out_dim = wo.shape[1]

    lead = x.shape[:-1]
    x2d = x.reshape((-1, in_dim))
    B = x2d.shape[0]

    # Lane packing factor: replicate the narrow layers P times on the block
    # diagonal so the hidden activations fill the 128 lanes of a vreg.
    max_dim = max(in_dim, h0, h1, out_dim)
    P = max(1, min(8, 128 // max_dim))

    # Pad the batch only to the pack * sublane granularity (no full-tile pad).
    B_total = _round_up(max(B, 1), P * 8)
    if B_total != B:
        x2d = jnp.pad(x2d, ((0, B_total - B), (0, 0)))
    Bp = B_total // P                                   # packed rows
    pk_in, pk_h0, pk_h1, pk_out = P * in_dim, P * h0, P * h1, P * out_dim
    x_pk = x2d.reshape((Bp, pk_in))                     # free row-major reshape

    # Row tile (in packed rows): amortizes per-step overhead; halve a
    # single-tile grid (when possible) so v7x megacore gets >= 2 steps.
    tb = min(tile_rows, Bp)
    if tb == Bp and Bp > 8:
        tb = _round_up(-(-Bp // 2), 8)
    grid = (pl.cdiv(Bp, tb),)

    # Block-diagonal bf16 weights (tiny, one-time prep); biases stay f32.
    cdt = jnp.bfloat16
    w0p = _block_diag(w0.astype(cdt), P)                # (pk_in,  pk_h0)
    w1p = _block_diag(w1.astype(cdt), P)                # (pk_h0,  pk_h1)
    wop = _block_diag(wo.astype(cdt), P)                # (pk_h1,  pk_out)
    b0p = jnp.tile(b0.astype(jnp.float32).reshape(1, -1), (1, P))
    b1p = jnp.tile(b1.astype(jnp.float32).reshape(1, -1), (1, P))
    bop = jnp.tile(bo.astype(jnp.float32).reshape(1, -1), (1, P))

    flops = 2 * Bp * (pk_in * pk_h0 + pk_h0 * pk_h1 + pk_h1 * pk_out)
    transcendentals = 2 * Bp * (pk_h0 + pk_h1)          # exp + log1p per hidden
    bytes_accessed = (
        x_pk.size * x_pk.dtype.itemsize                 # x stream (native dtype)
        + Bp * pk_out * 4                               # f32 output stream
        + (w0p.size + w1p.size + wop.size) * 2          # resident bf16 weights
        + (b0p.size + b1p.size + bop.size) * 4          # f32 biases
    )

    out_pk = pl.pallas_call(
        mlp_kernel,
        out_shape=jax.ShapeDtypeStruct((Bp, pk_out), jnp.float32),
        grid=grid,
        in_specs=[
            pl.BlockSpec((tb, pk_in), lambda i: (i, 0)),      # x: streamed
            pl.BlockSpec((pk_in, pk_h0), lambda i: (0, 0)),   # weights resident
            pl.BlockSpec((1, pk_h0), lambda i: (0, 0)),
            pl.BlockSpec((pk_h0, pk_h1), lambda i: (0, 0)),
            pl.BlockSpec((1, pk_h1), lambda i: (0, 0)),
            pl.BlockSpec((pk_h1, pk_out), lambda i: (0, 0)),
            pl.BlockSpec((1, pk_out), lambda i: (0, 0)),
        ],
        out_specs=pl.BlockSpec((tb, pk_out), lambda i: (i, 0)),
        compiler_params=pltpu.CompilerParams(
            dimension_semantics=("parallel",),
        ),
        cost_estimate=pl.CostEstimate(
            flops=flops,
            transcendentals=transcendentals,
            bytes_accessed=bytes_accessed,
        ),
    )(x_pk, w0p, b0p, w1p, b1p, wop, bop)

    # Un-interleave the lane packing with a free reshape, drop padded rows.
    out2d = out_pk.reshape((B_total, out_dim))[:B].astype(x.dtype)
    return out2d.reshape(lead + (out_dim,))


def init_params(key, input_dim, hidden_layer_sizes, output_dim, dtype=jnp.float32):
    """Deterministic synthetic init (uniform +-1/sqrt(fan_in), like torch Linear)."""
    sizes = [input_dim] + hidden_layer_sizes + [output_dim]
    names = ["0", "1", "o"]
    assert len(hidden_layer_sizes) == 2, "this script instantiates 2 hidden layers"
    params = {}
    keys = jax.random.split(key, len(names) * 2)
    for i, (fan_in, fan_out) in enumerate(zip(sizes[:-1], sizes[1:])):
        bound = 1.0 / (fan_in ** 0.5)
        w = jax.random.uniform(keys[2 * i], (fan_in, fan_out),
                               minval=-bound, maxval=bound, dtype=dtype)
        b = jax.random.uniform(keys[2 * i + 1], (1, fan_out),
                               minval=-bound, maxval=bound, dtype=dtype)
        params[f"w{names[i]}"] = w
        params[f"b{names[i]}"] = b
    return params


if __name__ == "__main__":
    key = jax.random.PRNGKey(0)
    k_x, k_p = jax.random.split(key)

    input_dim = 16
    hidden_layer_sizes = [32, 32]
    output_dim = 8

    # x: (..., in_dim) with extra leading dims, as the torch module allows.
    x = jax.random.normal(k_x, (2, 8, input_dim), dtype=jnp.float32)
    params = init_params(k_p, input_dim, hidden_layer_sizes, output_dim)

    out = mlp_forward(x, params)
    jax.block_until_ready(out)
    assert out.shape == (2, 8, output_dim)

    # Reference on the same bf16-weight / f32-accumulation compute path.
    def ref_bf16(x):
        cdt = jnp.bfloat16
        h = x.reshape((-1, input_dim)).astype(cdt)
        h = jax.nn.softplus(
            jnp.dot(h, params["w0"].astype(cdt),
                    preferred_element_type=jnp.float32) + params["b0"])
        h = jax.nn.softplus(
            jnp.dot(h.astype(cdt), params["w1"].astype(cdt),
                    preferred_element_type=jnp.float32) + params["b1"])
        h = jnp.dot(h.astype(cdt), params["wo"].astype(cdt),
                    preferred_element_type=jnp.float32) + params["bo"]
        return h.reshape(x.shape[:-1] + (output_dim,))

    r = ref_bf16(x)
    assert jnp.allclose(out, r, atol=2e-3, rtol=2e-3), float(
        jnp.max(jnp.abs(out - r)))

    # Also stay within bf16 rounding of the exact f32 math.
    def ref_f32(x):
        h = x.reshape((-1, input_dim))
        h = jax.nn.softplus(h @ params["w0"] + params["b0"])
        h = jax.nn.softplus(h @ params["w1"] + params["b1"])
        h = h @ params["wo"] + params["bo"]
        return h.reshape(x.shape[:-1] + (output_dim,))

    assert jnp.allclose(out, ref_f32(x), atol=5e-2, rtol=5e-2)

    print("KERNEL_OK")
</pallas_src>

<mosaic_0001>
module attributes {stable_mosaic.version = 11 : i64} {
  func.func @mlp_kernel(%arg0: i32, %arg1: memref<8x64xf32, #tpu.memory_space<vmem>>, %arg2: memref<64x128xbf16, #tpu.memory_space<vmem>>, %arg3: memref<1x128xf32, #tpu.memory_space<vmem>>, %arg4: memref<128x128xbf16, #tpu.memory_space<vmem>>, %arg5: memref<1x128xf32, #tpu.memory_space<vmem>>, %arg6: memref<128x32xbf16, #tpu.memory_space<vmem>>, %arg7: memref<1x32xf32, #tpu.memory_space<vmem>>, %arg8: memref<8x32xf32, #tpu.memory_space<vmem>>) attributes {dimension_semantics = [#tpu.dimension_semantics<parallel>], iteration_bounds = array<i64: 1>, scalar_prefetch = 0 : i64, scratch_operands = 0 : i64, tpu.core_type = #tpu.core_type<tc>, window_params = [{transform_indices = @transform_0, window_bounds = array<i64: 8, 64>}, {pipeline_mode = #tpu.pipeline_mode<synchronous>, transform_indices = @transform_1, window_bounds = array<i64: 64, 128>}, {pipeline_mode = #tpu.pipeline_mode<synchronous>, transform_indices = @transform_2, window_bounds = array<i64: 1, 128>}, {pipeline_mode = #tpu.pipeline_mode<synchronous>, transform_indices = @transform_3, window_bounds = array<i64: 128, 128>}, {pipeline_mode = #tpu.pipeline_mode<synchronous>, transform_indices = @transform_4, window_bounds = array<i64: 1, 128>}, {pipeline_mode = #tpu.pipeline_mode<synchronous>, transform_indices = @transform_5, window_bounds = array<i64: 128, 32>}, {pipeline_mode = #tpu.pipeline_mode<synchronous>, transform_indices = @transform_6, window_bounds = array<i64: 1, 32>}, {transform_indices = @transform_7, window_bounds = array<i64: 8, 32>}]} {
    %c0 = arith.constant 0 : index
    %c0_0 = arith.constant 0 : index
    %0 = vector.load %arg1[%c0, %c0_0] : memref<8x64xf32, #tpu.memory_space<vmem>>, vector<8x64xf32>
    %1 = arith.truncf %0 : vector<8x64xf32> to vector<8x64xbf16>
    %c0_1 = arith.constant 0 : index
    %c0_2 = arith.constant 0 : index
    %2 = vector.load %arg2[%c0_1, %c0_2] : memref<64x128xbf16, #tpu.memory_space<vmem>>, vector<64x128xbf16>
    %cst = arith.constant dense<0.000000e+00> : vector<8x128xf32>
    %3 = tpu.matmul %1, %2, %cst {dimension_numbers = #tpu.dot_dimension_numbers<[1], [0], [0], [1], [0, 0, 1, 1], [], []>} : vector<8x64xbf16>, vector<64x128xbf16>, vector<8x128xf32> -> vector<8x128xf32>
    %c0_3 = arith.constant 0 : index
    %c0_4 = arith.constant 0 : index
    %4 = vector.load %arg3[%c0_3, %c0_4] : memref<1x128xf32, #tpu.memory_space<vmem>>, vector<1x128xf32>
    %5 = vector.broadcast %4 : vector<1x128xf32> to vector<8x128xf32>
    %6 = arith.addf %3, %5 : vector<8x128xf32>
    %cst_5 = arith.constant 0.000000e+00 : f32
    %7 = vector.broadcast %cst_5 : f32 to vector<8x128xf32>
    %8 = arith.maximumf %6, %7 : vector<8x128xf32>
    %9 = math.absf %6 : vector<8x128xf32>
    %cst_6 = arith.constant 0.000000e+00 : f32
    %10 = vector.broadcast %cst_6 : f32 to vector<8x128xf32>
    %11 = arith.subf %10, %9 : vector<8x128xf32>
    %12 = math.exp %11 : vector<8x128xf32>
    %13 = math.log1p %12 : vector<8x128xf32>
    %14 = arith.addf %8, %13 : vector<8x128xf32>
    %15 = arith.truncf %14 : vector<8x128xf32> to vector<8x128xbf16>
    %c0_7 = arith.constant 0 : index
    %c0_8 = arith.constant 0 : index
    %16 = vector.load %arg4[%c0_7, %c0_8] : memref<128x128xbf16, #tpu.memory_space<vmem>>, vector<128x128xbf16>
    %cst_9 = arith.constant dense<0.000000e+00> : vector<8x128xf32>
    %17 = tpu.matmul %15, %16, %cst_9 {dimension_numbers = #tpu.dot_dimension_numbers<[1], [0], [0], [1], [0, 0, 1, 1], [], []>} : vector<8x128xbf16>, vector<128x128xbf16>, vector<8x128xf32> -> vector<8x128xf32>
    %c0_10 = arith.constant 0 : index
    %c0_11 = arith.constant 0 : index
    %18 = vector.load %arg5[%c0_10, %c0_11] : memref<1x128xf32, #tpu.memory_space<vmem>>, vector<1x128xf32>
    %19 = vector.broadcast %18 : vector<1x128xf32> to vector<8x128xf32>
    %20 = arith.addf %17, %19 : vector<8x128xf32>
    %cst_12 = arith.constant 0.000000e+00 : f32
    %21 = vector.broadcast %cst_12 : f32 to vector<8x128xf32>
    %22 = arith.maximumf %20, %21 : vector<8x128xf32>
    %23 = math.absf %20 : vector<8x128xf32>
    %cst_13 = arith.constant 0.000000e+00 : f32
    %24 = vector.broadcast %cst_13 : f32 to vector<8x128xf32>
    %25 = arith.subf %24, %23 : vector<8x128xf32>
    %26 = math.exp %25 : vector<8x128xf32>
    %27 = math.log1p %26 : vector<8x128xf32>
    %28 = arith.addf %22, %27 : vector<8x128xf32>
    %29 = arith.truncf %28 : vector<8x128xf32> to vector<8x128xbf16>
    %c0_14 = arith.constant 0 : index
    %c0_15 = arith.constant 0 : index
    %30 = vector.load %arg6[%c0_14, %c0_15] : memref<128x32xbf16, #tpu.memory_space<vmem>>, vector<128x32xbf16>
    %cst_16 = arith.constant dense<0.000000e+00> : vector<8x32xf32>
    %31 = tpu.matmul %29, %30, %cst_16 {dimension_numbers = #tpu.dot_dimension_numbers<[1], [0], [0], [1], [0, 0, 1, 1], [], []>} : vector<8x128xbf16>, vector<128x32xbf16>, vector<8x32xf32> -> vector<8x32xf32>
    %c0_17 = arith.constant 0 : index
    %c0_18 = arith.constant 0 : index
    %32 = vector.load %arg7[%c0_17, %c0_18] : memref<1x32xf32, #tpu.memory_space<vmem>>, vector<1x32xf32>
    %33 = vector.broadcast %32 : vector<1x32xf32> to vector<8x32xf32>
    %34 = arith.addf %31, %33 : vector<8x32xf32>
    %c0_19 = arith.constant 0 : index
    %c0_20 = arith.constant 0 : index
    %35 = vector.load %arg8[%c0_19, %c0_20] : memref<8x32xf32, #tpu.memory_space<vmem>>, vector<8x32xf32>
    tpu.vector_store %arg8[%c0_19, %c0_20], %34 {strides = array<i32>} : memref<8x32xf32, #tpu.memory_space<vmem>>, vector<8x32xf32>,
    return
  }
  func.func @transform_0(%arg0: i32) -> (i32, i32) {
    %c0_i32 = arith.constant 0 : i32
    %c0_i32_0 = arith.constant 0 : i32
    return %arg0, %c0_i32 : i32, i32
  }
  func.func @transform_1(%arg0: i32) -> (i32, i32) {
    %c0_i32 = arith.constant 0 : i32
    %c0_i32_0 = arith.constant 0 : i32
    %c0_i32_1 = arith.constant 0 : i32
    return %c0_i32, %c0_i32_0 : i32, i32
  }
  func.func @transform_2(%arg0: i32) -> (i32, i32) {
    %c0_i32 = arith.constant 0 : i32
    %c0_i32_0 = arith.constant 0 : i32
    %c0_i32_1 = arith.constant 0 : i32
    return %c0_i32, %c0_i32_0 : i32, i32
  }
  func.func @transform_3(%arg0: i32) -> (i32, i32) {
    %c0_i32 = arith.constant 0 : i32
    %c0_i32_0 = arith.constant 0 : i32
    %c0_i32_1 = arith.constant 0 : i32
    return %c0_i32, %c0_i32_0 : i32, i32
  }
  func.func @transform_4(%arg0: i32) -> (i32, i32) {
    %c0_i32 = arith.constant 0 : i32
    %c0_i32_0 = arith.constant 0 : i32
    %c0_i32_1 = arith.constant 0 : i32
    return %c0_i32, %c0_i32_0 : i32, i32
  }
  func.func @transform_5(%arg0: i32) -> (i32, i32) {
    %c0_i32 = arith.constant 0 : i32
    %c0_i32_0 = arith.constant 0 : i32
    %c0_i32_1 = arith.constant 0 : i32
    return %c0_i32, %c0_i32_0 : i32, i32
  }
  func.func @transform_6(%arg0: i32) -> (i32, i32) {
    %c0_i32 = arith.constant 0 : i32
    %c0_i32_0 = arith.constant 0 : i32
    %c0_i32_1 = arith.constant 0 : i32
    return %c0_i32, %c0_i32_0 : i32, i32
  }
  func.func @transform_7(%arg0: i32) -> (i32, i32) {
    %c0_i32 = arith.constant 0 : i32
    %c0_i32_0 = arith.constant 0 : i32
    return %arg0, %c0_i32 : i32, i32
  }
}

</mosaic_0001>

<llo_original>
// kernel: tpu_custom_call.1
$region0: #{tpu_custom_call.1}
  #allocation0 [shape = 'u32[]', space=smem, size = 0x4, offset = 0x4, fixed_abs, tag = 'smem constant byte address 0x4 - core index']
  #allocation1 [shape = 'u32[144,128]{1,0:T(1,128)}', space=vmem, size = 0x12000, scoped, tag = 'internal scratch']
  %s0 = inlined_call_operand.vmem [shape: f32[8,64], index: 0, kind: input, shape index: {}]
  %s1 = inlined_call_operand.hbm [shape: bf16[64,128], index: 1, kind: input, shape index: {}]
  %s2 = inlined_call_operand.vmem [shape: f32[1,128], index: 2, kind: input, shape index: {}]
  %s3 = inlined_call_operand.vmem [shape: bf16[128,128], index: 3, kind: input, shape index: {}]
  %s4 = inlined_call_operand.vmem [shape: f32[1,128], index: 4, kind: input, shape index: {}]
  %s5 = inlined_call_operand.vmem [shape: bf16[128,32], index: 5, kind: input, shape index: {}]
  %s6 = inlined_call_operand.vmem [shape: f32[1,32], index: 6, kind: input, shape index: {}]
  %s7 = inlined_call_operand.hbm [shape: f32[8,32], index: 7, kind: output, shape index: {}]
  %s8 = sld [smem:[#allocation0]]
  $region42: #{tpu_custom_call.1} parent=0
    _
  %s10 = ssub.s32 1, %s8
  %s11 = scalar_select 0, %s10, %s8
  $region1: #{tpu_custom_call.1} parent=0
    #allocation2 [shape = 'u8[16384]{0}', space=vmem, size = 0x4000, scoped, tag = 'input window, operand 1, single buffered']
    #allocation3 [shape = 's32[1]{0}', space=sflag, size = 0x4, scoped, tag = 'scoped memory for tpu_custom_call.1']
    #allocation4 [shape = 's32[1]{0}', space=sflag, size = 0x4, scoped, tag = 'scoped memory for tpu_custom_call.1']
    #allocation5 [shape = 'u8[4096]{0}', space=vmem, size = 0x1000, scoped, tag = 'output window, operand 0, single buffered']
    %12 = vsyncpa [#allocation3], 0
    %13 = vsyncpa [#allocation4], 0
    // Predicated region
    $region2: #{tpu_custom_call.1} parent=1 // pred_check
      _
    $region3: #{tpu_custom_call.1} parent=1 // pred_check_branch
      %15 = sbr.rel (0) target = $region5
    $region4: #{tpu_custom_call.1} parent=1 // pred_region
      _
    $region5: #{tpu_custom_call.1} parent=1 // pred_fallthru
      _
    // Predicated region
    $region6: #{tpu_custom_call.1} parent=1 // pred_check
      _
    $region7: #{tpu_custom_call.1} parent=1 // pred_check_branch
      %17 = sbr.rel (0) target = $region9
    $region8: #{tpu_custom_call.1} parent=1 // pred_region
      %s19 = ssub.s32 512, 512
      %20 = vsyncadd [#allocation3], %s19
      %s21 = sshll.u32 [#allocation2], 4
      %s22 = int_to_ptr.vmem [resolvable:$true] %s21
      %27 = dma.hbm_to_vmem [thread:$0]  %s1, 512, %s22, [#allocation3], 64, 64, 4
    $region9: #{tpu_custom_call.1} parent=1 // pred_fallthru
      _
    // Predicated region
    $region10: #{tpu_custom_call.1} parent=1 // pred_check
      _
    $region11: #{tpu_custom_call.1} parent=1 // pred_check_branch
      %29 = sbr.rel (0) target = $region13
    $region12: #{tpu_custom_call.1} parent=1 // pred_region
      _
    $region13: #{tpu_custom_call.1} parent=1 // pred_fallthru
      _
    // Predicated region
    $region14: #{tpu_custom_call.1} parent=1 // pred_check
      _
    $region15: #{tpu_custom_call.1} parent=1 // pred_check_branch
      %31 = sbr.rel (0) target = $region17
    $region16: #{tpu_custom_call.1} parent=1 // pred_region
      _
    $region17: #{tpu_custom_call.1} parent=1 // pred_fallthru
      _
    // Predicated region
    $region18: #{tpu_custom_call.1} parent=1 // pred_check
      _
    $region19: #{tpu_custom_call.1} parent=1 // pred_check_branch
      %33 = sbr.rel (0) target = $region21
    $region20: #{tpu_custom_call.1} parent=1 // pred_region
      _
    $region21: #{tpu_custom_call.1} parent=1 // pred_fallthru
      _
    // Predicated region
    $region22: #{tpu_custom_call.1} parent=1 // pred_check
      _
    $region23: #{tpu_custom_call.1} parent=1 // pred_check_branch
      %35 = sbr.rel (0) target = $region25
    $region24: #{tpu_custom_call.1} parent=1 // pred_region
      _
    $region25: #{tpu_custom_call.1} parent=1 // pred_fallthru
      _
    // Predicated region
    $region26: #{tpu_custom_call.1} parent=1 // pred_check
      _
    $region27: #{tpu_custom_call.1} parent=1 // pred_check_branch
      %37 = sbr.rel (0) target = $region29
    $region28: #{tpu_custom_call.1} parent=1 // pred_region
      _
    $region29: #{tpu_custom_call.1} parent=1 // pred_fallthru
      _
    // Predicated region
    $region30: #{tpu_custom_call.1} parent=1 // pred_check
      _
    $region31: #{tpu_custom_call.1} parent=1 // pred_check_branch
      %39 = sbr.rel (0) target = $region33
    $region32: #{tpu_custom_call.1} parent=1 // pred_region
      %40 = dma.done [#allocation3], 512
    $region33: #{tpu_custom_call.1} parent=1 // pred_fallthru
      _
    %v42 = vld [vmem:[%s0] sm:$0xff]
    %v43 = vpack.c.bf16 %v42, %v42
    %v44 = vld [vmem:[#allocation2] sm:$0xf]
    %v45 = vld [vmem:[#allocation2 + $0x4] sm:$0xf]
    %v46 = vld [vmem:[#allocation2 + $0x8] sm:$0xf]
    %v47 = vld [vmem:[#allocation2 + $0xc] sm:$0xf]
    %v48 = vld [vmem:[#allocation2 + $0x10] sm:$0xf]
    %v49 = vld [vmem:[#allocation2 + $0x14] sm:$0xf]
    %v50 = vld [vmem:[#allocation2 + $0x18] sm:$0xf]
    %v51 = vld [vmem:[#allocation2 + $0x1c] sm:$0xf]
    %v52 = vld [vmem:[%s2] sm:$0x1]
    %v54 = vlaneseq
    %v55 = vshrl.u32 %v54, 7
    %v56 = vsub.s32 0, %v55
    %v57 = vrot.slane %v52, %v56
    %v67 = vunpack.c.l.b16 %v44
    %v68 = vunpack.c.l.b16 %v45
    %v69 = vunpack.c.l.b16 %v46
    %v70 = vunpack.c.l.b16 %v47
    %v71 = vunpack.c.l.b16 %v48
    %v72 = vunpack.c.l.b16 %v49
    %v73 = vunpack.c.l.b16 %v50
    %v74 = vunpack.c.l.b16 %v51
    %v75 = vpack.c.b16 %v68, %v67
    %v76 = vpack.c.b16 %v70, %v69
    %v77 = vpack.c.b16 %v72, %v71
    %v78 = vpack.c.b16 %v74, %v73
    %vm83 = vcmask 523264
    %v85 = vsel %vm83, %v43, 0
    %87 = vmatprep.subr.bf16.mxu0 0
    %88 = vmatpush1.bf16.msra.mxu0 %v75
    %89 = vmatprep.subr.bf16.mxu0 0
    %90 = vmatpush1.bf16.msra.mxu0 %v76
    %91 = vmatprep.subr.bf16.mxu0 0
    %92 = vmatpush1.bf16.msra.mxu0 %v77
    %93 = vmatprep.subr.bf16.mxu0 0
    %94 = vmatpush1.bf16.msra.mxu0 %v78
    %95 = vmatprep.subr.bf16.mxu0 0
    %96 = vmatpush1.bf16.msra.mxu0 0
    %97 = vmatprep.subr.bf16.mxu0 0
    %98 = vmatpush1.bf16.msra.mxu0 0
    %99 = vmatprep.subr.bf16.mxu0 0
    %100 = vmatpush1.bf16.msra.mxu0 0
    %101 = vmatprep.subr.bf16.mxu0 0
    %102 = vmatpush1.bf16.msra.mxu0 0
    %103 = vmatprep.subr.bf16.mxu0 0
    %104 = vmatpush1.bf16.msra.mxu0 0
    %105 = vmatprep.subr.bf16.mxu0 0
    %106 = vmatpush1.bf16.msra.mxu0 0
    %107 = vmatprep.subr.bf16.mxu0 0
    %108 = vmatpush1.bf16.msra.mxu0 0
    %109 = vmatprep.subr.bf16.mxu0 0
    %110 = vmatpush1.bf16.msra.mxu0 0
    %111 = vmatprep.subr.bf16.mxu0 0
    %112 = vmatpush1.bf16.msra.mxu0 0
    %113 = vmatprep.subr.bf16.mxu0 0
    %114 = vmatpush1.bf16.msra.mxu0 0
    %115 = vmatprep.subr.bf16.mxu0 0
    %116 = vmatpush1.bf16.msra.mxu0 0
    %117 = vmatprep.subr.bf16.mxu0 0
    %118 = vmatpush1.bf16.msra.mxu0 0
    %119 = vmatprep.mubr.bf16.mxu0 0
    %120 = vmatmul.mubr.bf16.gmra.mrb[0].mxu0 %v85
    %v121 = vpop.f32.mrb[0].mxu0
    %v122 = vadd.f32 %v57, %v121
    %v123 = vpop.f32.mrb[0].mxu0
    %v124 = vpop.f32.mrb[0].mxu0
    %v125 = vpop.f32.mrb[0].mxu0
    %126 = vdwg.mxu0
    %v127 = vmax.f32 %v122, 0.0
    %v128 = vand.u32 2147483647, %v122
    %v129 = vsub.f32 0.0, %v128
    %v130 = vmul.f32 %v129, 1.442695
    %v131 = vpow.pop %v130
    %v132 = vadd.f32 %v131, 1.0
    %v133 = vlog2.pop %v132
    %v134 = vmul.f32 %v133, 0.6931472
    %v135 = vmul.f32 -0.5, %v131
    %v136 = vadd.f32 %v135, 1.0
    %v137 = vmul.f32 %v136, %v131
    %v138 = vand.u32 2147483647, %v131
    %vm139 = vcmp.lt.f32.partialorder %v138, 0.0004427343
    %v140 = vsel %vm139, %v137, %v134
    %v141 = vadd.f32 %v127, %v140
    %v142 = vpack.c.bf16 %v141, %v141
    %v143 = vld [vmem:[%s3] sm:$0xf]
    %v144 = vld [vmem:[%s3 + $0x4] sm:$0xf]
    %v145 = vld [vmem:[%s3 + $0x8] sm:$0xf]
    %v146 = vld [vmem:[%s3 + $0xc] sm:$0xf]
    %v147 = vld [vmem:[%s3 + $0x10] sm:$0xf]
    %v148 = vld [vmem:[%s3 + $0x14] sm:$0xf]
    %v149 = vld [vmem:[%s3 + $0x18] sm:$0xf]
    %v150 = vld [vmem:[%s3 + $0x1c] sm:$0xf]
    %v151 = vld [vmem:[%s3 + $0x20] sm:$0xf]
    %v152 = vld [vmem:[%s3 + $0x24] sm:$0xf]
    %v153 = vld [vmem:[%s3 + $0x28] sm:$0xf]
    %v154 = vld [vmem:[%s3 + $0x2c] sm:$0xf]
    %v155 = vld [vmem:[%s3 + $0x30] sm:$0xf]
    %v156 = vld [vmem:[%s3 + $0x34] sm:$0xf]
    %v157 = vld [vmem:[%s3 + $0x38] sm:$0xf]
    %v158 = vld [vmem:[%s3 + $0x3c] sm:$0xf]
    %v159 = vld [vmem:[%s4] sm:$0x1]
    %v161 = vlaneseq
    %v162 = vshrl.u32 %v161, 7
    %v163 = vsub.s32 0, %v162
    %v164 = vrot.slane %v159, %v163
    %v182 = vunpack.c.l.b16 %v143
    %v183 = vunpack.c.l.b16 %v144
    %v184 = vunpack.c.l.b16 %v145
    %v185 = vunpack.c.l.b16 %v146
    %v186 = vunpack.c.l.b16 %v147
    %v187 = vunpack.c.l.b16 %v148
    %v188 = vunpack.c.l.b16 %v149
    %v189 = vunpack.c.l.b16 %v150
    %v190 = vunpack.c.l.b16 %v151
    %v191 = vunpack.c.l.b16 %v152
    %v192 = vunpack.c.l.b16 %v153
    %v193 = vunpack.c.l.b16 %v154
    %v194 = vunpack.c.l.b16 %v155
    %v195 = vunpack.c.l.b16 %v156
    %v196 = vunpack.c.l.b16 %v157
    %v197 = vunpack.c.l.b16 %v158
    %v198 = vpack.c.b16 %v183, %v182
    %v199 = vpack.c.b16 %v185, %v184
    %v200 = vpack.c.b16 %v187, %v186
    %v201 = vpack.c.b16 %v189, %v188
    %v202 = vpack.c.b16 %v191, %v190
    %v203 = vpack.c.b16 %v193, %v192
    %v204 = vpack.c.b16 %v195, %v194
    %v205 = vpack.c.b16 %v197, %v196
    %214 = vmatprep.subr.bf16.mxu0 0
    %215 = vmatpush1.bf16.msra.mxu0 %v198
    %216 = vmatprep.subr.bf16.mxu0 0
    %217 = vmatpush1.bf16.msra.mxu0 %v199
    %218 = vmatprep.subr.bf16.mxu0 0
    %219 = vmatpush1.bf16.msra.mxu0 %v200
    %220 = vmatprep.subr.bf16.mxu0 0
    %221 = vmatpush1.bf16.msra.mxu0 %v201
    %222 = vmatprep.subr.bf16.mxu0 0
    %223 = vmatpush1.bf16.msra.mxu0 %v202
    %224 = vmatprep.subr.bf16.mxu0 0
    %225 = vmatpush1.bf16.msra.mxu0 %v203
    %226 = vmatprep.subr.bf16.mxu0 0
    %227 = vmatpush1.bf16.msra.mxu0 %v204
    %228 = vmatprep.subr.bf16.mxu0 0
    %229 = vmatpush1.bf16.msra.mxu0 %v205
    %230 = vmatprep.subr.bf16.mxu0 0
    %231 = vmatpush1.bf16.msra.mxu0 0
    %232 = vmatprep.subr.bf16.mxu0 0
    %233 = vmatpush1.bf16.msra.mxu0 0
    %234 = vmatprep.subr.bf16.mxu0 0
    %235 = vmatpush1.bf16.msra.mxu0 0
    %236 = vmatprep.subr.bf16.mxu0 0
    %237 = vmatpush1.bf16.msra.mxu0 0
    %238 = vmatprep.subr.bf16.mxu0 0
    %239 = vmatpush1.bf16.msra.mxu0 0
    %240 = vmatprep.subr.bf16.mxu0 0
    %241 = vmatpush1.bf16.msra.mxu0 0
    %242 = vmatprep.subr.bf16.mxu0 0
    %243 = vmatpush1.bf16.msra.mxu0 0
    %244 = vmatprep.subr.bf16.mxu0 0
    %245 = vmatpush1.bf16.msra.mxu0 0
    %246 = vmatprep.mubr.bf16.mxu0 0
    %247 = vmatmul.mubr.bf16.gmra.mrb[0].mxu0 %v142
    %v248 = vpop.f32.mrb[0].mxu0
    %v249 = vadd.f32 %v164, %v248
    %v250 = vpop.f32.mrb[0].mxu0
    %v251 = vpop.f32.mrb[0].mxu0
    %v252 = vpop.f32.mrb[0].mxu0
    %253 = vdwg.mxu0
    %v254 = vmax.f32 %v249, 0.0
    %v255 = vand.u32 2147483647, %v249
    %v256 = vsub.f32 0.0, %v255
    %v257 = vmul.f32 %v256, 1.442695
    %v258 = vpow.pop %v257
    %v259 = vadd.f32 %v258, 1.0
    %v260 = vlog2.pop %v259
    %v261 = vmul.f32 %v260, 0.6931472
    %v262 = vmul.f32 -0.5, %v258
    %v263 = vadd.f32 %v262, 1.0
    %v264 = vmul.f32 %v263, %v258
    %v265 = vand.u32 2147483647, %v258
    %vm266 = vcmp.lt.f32.partialorder %v265, 0.0004427343
    %v267 = vsel %vm266, %v264, %v261
    %v268 = vadd.f32 %v254, %v267
    %v269 = vpack.c.bf16 %v268, %v268
    %v270 = vld [vmem:[%s5] sm:$0xf]
    %v271 = vld [vmem:[%s5 + $0x4] sm:$0xf]
    %v272 = vld [vmem:[%s5 + $0x8] sm:$0xf]
    %v273 = vld [vmem:[%s5 + $0xc] sm:$0xf]
    %v274 = vld [vmem:[%s5 + $0x10] sm:$0xf]
    %v275 = vld [vmem:[%s5 + $0x14] sm:$0xf]
    %v276 = vld [vmem:[%s5 + $0x18] sm:$0xf]
    %v277 = vld [vmem:[%s5 + $0x1c] sm:$0xf]
    %v278 = vld [vmem:[%s5 + $0x20] sm:$0xf]
    %v279 = vld [vmem:[%s5 + $0x24] sm:$0xf]
    %v280 = vld [vmem:[%s5 + $0x28] sm:$0xf]
    %v281 = vld [vmem:[%s5 + $0x2c] sm:$0xf]
    %v282 = vld [vmem:[%s5 + $0x30] sm:$0xf]
    %v283 = vld [vmem:[%s5 + $0x34] sm:$0xf]
    %v284 = vld [vmem:[%s5 + $0x38] sm:$0xf]
    %v285 = vld [vmem:[%s5 + $0x3c] sm:$0xf]
    %v286 = vld [vmem:[%s6] sm:$0x1]
    %v288 = vlaneseq
    %v289 = vshrl.u32 %v288, 7
    %v290 = vsub.s32 0, %v289
    %v291 = vrot.slane %v286, %v290
    %v309 = vunpack.c.l.b16 %v270
    %v310 = vunpack.c.l.b16 %v271
    %v311 = vunpack.c.l.b16 %v272
    %v312 = vunpack.c.l.b16 %v273
    %v313 = vunpack.c.l.b16 %v274
    %v314 = vunpack.c.l.b16 %v275
    %v315 = vunpack.c.l.b16 %v276
    %v316 = vunpack.c.l.b16 %v277
    %v317 = vunpack.c.l.b16 %v278
    %v318 = vunpack.c.l.b16 %v279
    %v319 = vunpack.c.l.b16 %v280
    %v320 = vunpack.c.l.b16 %v281
    %v321 = vunpack.c.l.b16 %v282
    %v322 = vunpack.c.l.b16 %v283
    %v323 = vunpack.c.l.b16 %v284
    %v324 = vunpack.c.l.b16 %v285
    %v325 = vpack.c.b16 %v310, %v309
    %v326 = vpack.c.b16 %v312, %v311
    %v327 = vpack.c.b16 %v314, %v313
    %v328 = vpack.c.b16 %v316, %v315
    %v329 = vpack.c.b16 %v318, %v317
    %v330 = vpack.c.b16 %v320, %v319
    %v331 = vpack.c.b16 %v322, %v321
    %v332 = vpack.c.b16 %v324, %v323
    %341 = vmatprep.subr.bf16.mxu0 0
    %342 = vmatpush1.bf16.msra.mxu0 %v325
    %343 = vmatprep.subr.bf16.mxu0 0
    %344 = vmatpush1.bf16.msra.mxu0 %v326
    %345 = vmatprep.subr.bf16.mxu0 0
    %346 = vmatpush1.bf16.msra.mxu0 %v327
    %347 = vmatprep.subr.bf16.mxu0 0
    %348 = vmatpush1.bf16.msra.mxu0 %v328
    %349 = vmatprep.subr.bf16.mxu0 0
    %350 = vmatpush1.bf16.msra.mxu0 %v329
    %351 = vmatprep.subr.bf16.mxu0 0
    %352 = vmatpush1.bf16.msra.mxu0 %v330
    %353 = vmatprep.subr.bf16.mxu0 0
    %354 = vmatpush1.bf16.msra.mxu0 %v331
    %355 = vmatprep.subr.bf16.mxu0 0
    %356 = vmatpush1.bf16.msra.mxu0 %v332
    %357 = vmatprep.subr.bf16.mxu0 0
    %358 = vmatpush1.bf16.msra.mxu0 0
    %359 = vmatprep.subr.bf16.mxu0 0
    %360 = vmatpush1.bf16.msra.mxu0 0
    %361 = vmatprep.subr.bf16.mxu0 0
    %362 = vmatpush1.bf16.msra.mxu0 0
    %363 = vmatprep.subr.bf16.mxu0 0
    %364 = vmatpush1.bf16.msra.mxu0 0
    %365 = vmatprep.subr.bf16.mxu0 0
    %366 = vmatpush1.bf16.msra.mxu0 0
    %367 = vmatprep.subr.bf16.mxu0 0
    %368 = vmatpush1.bf16.msra.mxu0 0
    %369 = vmatprep.subr.bf16.mxu0 0
    %370 = vmatpush1.bf16.msra.mxu0 0
    %371 = vmatprep.subr.bf16.mxu0 0
    %372 = vmatpush1.bf16.msra.mxu0 0
    %373 = vmatprep.mubr.bf16.mxu0 0
    %374 = vmatmul.mubr.bf16.gmra.mrb[0].mxu0 %v269
    %v375 = vpop.f32.mrb[0].mxu0
    %v376 = vadd.f32 %v291, %v375
    %v377 = vpop.f32.mrb[0].mxu0
    %v378 = vpop.f32.mrb[0].mxu0
    %v379 = vpop.f32.mrb[0].mxu0
    %380 = vdwg.mxu0
    %vm381 = vcmask 261120
    %382 = vst.msk [vmem:[#allocation5] sm:$0xff] %vm381, %v376
    // Predicated region
    $region34: #{tpu_custom_call.1} parent=1 // pred_check
      _
    $region35: #{tpu_custom_call.1} parent=1 // pred_check_branch
      %384 = sbr.rel (0) target = $region37
    $region36: #{tpu_custom_call.1} parent=1 // pred_region
      %s386 = ssub.s32 128, 128
      %387 = vsyncadd [#allocation4], %s386
      %s389 = sshll.u32 [#allocation5], 4
      %s390 = int_to_ptr.vmem [resolvable:$true] %s389
      %392 = dma.vmem_to_hbm [thread:$0]  %s390, 128, %s7, [#allocation4]
    $region37: #{tpu_custom_call.1} parent=1 // pred_fallthru
      _
    // Predicated region
    $region38: #{tpu_custom_call.1} parent=1 // pred_check
      _
    $region39: #{tpu_custom_call.1} parent=1 // pred_check_branch
      %394 = sbr.rel (0) target = $region41
    $region40: #{tpu_custom_call.1} parent=1 // pred_region
      %395 = dma.done [#allocation4], 128
    $region41: #{tpu_custom_call.1} parent=1 // pred_fallthru
      _
    %396 = vsyncpa [#allocation3], 1
    %397 = vsyncpa [#allocation4], 1

</llo_original>
